<compile_context>
chip_gen: v5e
topology: v5e:2x2
jax: 0.10.0
libtpu: 0.0.40
codegen_flags: <defaults>
</compile_context>

<pallas_src>
import functools

import jax
import jax.numpy as jnp
from jax import lax
from jax.experimental import pallas as pl
from jax.experimental.pallas import tpu as pltpu


def rnn_chunk_kernel(g_ref, h_ref, *, chunk, tail):
    """One grid step == one chunk of RNN time steps.

    g_ref : (chunk, 12)  pre-gated inputs for this chunk (flattened (3,4))
    h_ref : (1, 12)      hidden-state carry; VMEM-resident across the grid
    """
    c = pl.program_id(0)

    @pl.when(c == 0)
    def _():
        h_ref[...] = jnp.zeros_like(h_ref)

    def body(j, h):
        # One VPU add + one EUP tanh per step; nothing else on the chain.
        return jnp.tanh(g_ref[pl.ds(j, 1), :] + h)

    def run(n):
        unroll = True if n <= 32 else 8
        h_ref[...] = lax.fori_loop(0, n, body, h_ref[...], unroll=unroll)

    if tail == chunk:
        # Every chunk (including the last) is full: one unmasked loop.
        run(chunk)
    else:
        last = pl.num_programs(0) - 1

        @pl.when(c != last)
        def _():
            run(chunk)            # full, unmasked

        @pl.when(c == last)
        def _():
            run(tail)             # static shorter loop; padded rows never read


def my_rnn_loop(xs, weight, bias, *, time_chunk=1024):
    """xs: (T, 3, 4) f32; weight: (4, 4) (out, in) like torch Linear; bias: (4,)."""
    xs = jnp.asarray(xs, jnp.float32)
    T = xs.shape[0]
    w = jnp.asarray(weight, jnp.float32)
    b = jnp.asarray(bias, jnp.float32)

    if T == 0:                                      # grid of 0 steps -> zeros
        h0 = jnp.zeros((3, 4), jnp.float32)
        return h0, h0

    # ---- Hoisted Linear(4,4) + MyDecisionGate, batched over all T in XLA ----
    lin = jnp.einsum("tri,oi->tro", xs, w) + b                # (T, 3, 4)
    s = jnp.sum(lin, axis=(1, 2), keepdims=True)              # full per-step sum
    gated = jnp.where(s > 0.0, lin, -lin).reshape(T, 12)      # (T, 12), lane-dense

    # ---- Chunking: single chunk if it fits, else sublane-aligned chunks -----
    if T <= time_chunk:
        chunk = T
    else:
        chunk = max(8, (min(time_chunk, T) // 8) * 8)         # multiple of 8
    n_chunks = pl.cdiv(T, chunk)
    padded_t = n_chunks * chunk
    tail = T - (n_chunks - 1) * chunk                         # 1 <= tail <= chunk
    if padded_t != T:
        gated = jnp.concatenate(
            [gated, jnp.zeros((padded_t - T, 12), jnp.float32)], axis=0)

    kernel = functools.partial(rnn_chunk_kernel, chunk=chunk, tail=tail)

    h = pl.pallas_call(
        kernel,
        out_shape=jax.ShapeDtypeStruct((1, 12), jnp.float32),
        grid_spec=pltpu.PrefetchScalarGridSpec(
            num_scalar_prefetch=0,
            grid=(n_chunks,),
            in_specs=[
                pl.BlockSpec((chunk, 12), lambda c: (c, 0)),   # gated chunk (pipelined)
            ],
            out_specs=pl.BlockSpec((1, 12), lambda c: (0, 0)),  # h carry (resident)
        ),
        compiler_params=pltpu.CompilerParams(
            dimension_semantics=("arbitrary",),   # serial recurrence over chunks
        ),
    )(gated)

    h = h.reshape(3, 4)
    return h, h


def reference(xs, weight, bias):
    """Pure-JAX reference mirroring the PyTorch forward."""
    h = jnp.zeros((3, 4), jnp.float32)
    y = jnp.zeros((3, 4), jnp.float32)
    for i in range(xs.shape[0]):
        lin = xs[i] @ weight.T + bias
        gated = jnp.where(jnp.sum(lin) > 0, lin, -lin)
        new_h = jnp.tanh(gated + h)
        y, h = new_h, new_h
    return y, h


if __name__ == "__main__":
    key = jax.random.PRNGKey(0)
    k_xs, k_w, k_b, k_xs2 = jax.random.split(key, 4)

    # Deterministic Linear(4, 4) init (uniform in +/- 1/sqrt(fan_in), like torch).
    bound = 1.0 / jnp.sqrt(4.0)
    weight = jax.random.uniform(k_w, (4, 4), jnp.float32, -bound, bound)
    bias = jax.random.uniform(k_b, (4,), jnp.float32, -bound, bound)

    # Case 1: seq=8, single chunk (whole sequence in one grid step).
    T = 8
    xs = jax.random.normal(k_xs, (T, 3, 4), dtype=jnp.float32)
    y_exp, h_exp = reference(xs, weight, bias)
    y, h = my_rnn_loop(xs, weight, bias)
    jax.block_until_ready((y, h))
    assert jnp.allclose(y, y_exp, atol=1e-5), "y mismatch vs reference (single chunk)"
    assert jnp.allclose(h, h_exp, atol=1e-5), "h mismatch vs reference (single chunk)"

    # Case 2: longer sequence, multi-chunk with a ragged tail
    # (exercises the VMEM-resident h carry and the static tail loop).
    T2 = 20
    xs2 = jax.random.normal(k_xs2, (T2, 3, 4), dtype=jnp.float32)
    y2_exp, h2_exp = reference(xs2, weight, bias)
    y2, h2 = my_rnn_loop(xs2, weight, bias, time_chunk=8)
    jax.block_until_ready((y2, h2))
    assert jnp.allclose(y2, y2_exp, atol=1e-5), "y mismatch vs reference (chunked)"
    assert jnp.allclose(h2, h2_exp, atol=1e-5), "h mismatch vs reference (chunked)"

    print("KERNEL_OK")
</pallas_src>

<mosaic_0001>
module attributes {stable_mosaic.version = 11 : i64} {
  func.func @rnn_chunk_kernel(%arg0: i32, %arg1: memref<8x12xf32, #tpu.memory_space<vmem>>, %arg2: memref<1x12xf32, #tpu.memory_space<vmem>>) attributes {dimension_semantics = [#tpu.dimension_semantics<arbitrary>], iteration_bounds = array<i64: 1>, scalar_prefetch = 0 : i64, scratch_operands = 0 : i64, tpu.core_type = #tpu.core_type<tc>, window_params = [{transform_indices = @transform_0, window_bounds = array<i64: 8, 12>}, {pipeline_mode = #tpu.pipeline_mode<synchronous>, transform_indices = @transform_1, window_bounds = array<i64: 1, 12>}]} {
    %c0_i32 = arith.constant 0 : i32
    %0 = arith.cmpi eq, %arg0, %c0_i32 : i32
    %1 = arith.extui %0 : i1 to i32
    %c0_i32_0 = arith.constant 0 : i32
    %2 = arith.cmpi ne, %1, %c0_i32_0 : i32
    scf.if %2 {
      %cst = arith.constant 0.000000e+00 : f32
      %37 = vector.broadcast %cst : f32 to vector<1x12xf32>
      %c0_13 = arith.constant 0 : index
      %c0_14 = arith.constant 0 : index
      %38 = vector.load %arg2[%c0_13, %c0_14] : memref<1x12xf32, #tpu.memory_space<vmem>>, vector<1x12xf32>
      tpu.vector_store %arg2[%c0_13, %c0_14], %37 {strides = array<i32>} : memref<1x12xf32, #tpu.memory_space<vmem>>, vector<1x12xf32>,
    } else {
    }
    %c0 = arith.constant 0 : index
    %c0_1 = arith.constant 0 : index
    %3 = vector.load %arg2[%c0, %c0_1] : memref<1x12xf32, #tpu.memory_space<vmem>>, vector<1x12xf32>
    %c0_i32_2 = arith.constant 0 : i32
    %4 = arith.index_cast %c0_i32_2 : i32 to index
    %c0_3 = arith.constant 0 : index
    %5 = vector.load %arg1[%4, %c0_3] : memref<8x12xf32, #tpu.memory_space<vmem>>, vector<1x12xf32>
    %6 = arith.addf %5, %3 : vector<1x12xf32>
    %7 = math.tanh %6 : vector<1x12xf32>
    %c1_i32 = arith.constant 1 : i32
    %8 = arith.index_cast %c1_i32 : i32 to index
    %c0_4 = arith.constant 0 : index
    %9 = vector.load %arg1[%8, %c0_4] : memref<8x12xf32, #tpu.memory_space<vmem>>, vector<1x12xf32>
    %10 = arith.addf %9, %7 : vector<1x12xf32>
    %11 = math.tanh %10 : vector<1x12xf32>
    %c2_i32 = arith.constant 2 : i32
    %12 = arith.index_cast %c2_i32 : i32 to index
    %c0_5 = arith.constant 0 : index
    %13 = vector.load %arg1[%12, %c0_5] : memref<8x12xf32, #tpu.memory_space<vmem>>, vector<1x12xf32>
    %14 = arith.addf %13, %11 : vector<1x12xf32>
    %15 = math.tanh %14 : vector<1x12xf32>
    %c3_i32 = arith.constant 3 : i32
    %16 = arith.index_cast %c3_i32 : i32 to index
    %c0_6 = arith.constant 0 : index
    %17 = vector.load %arg1[%16, %c0_6] : memref<8x12xf32, #tpu.memory_space<vmem>>, vector<1x12xf32>
    %18 = arith.addf %17, %15 : vector<1x12xf32>
    %19 = math.tanh %18 : vector<1x12xf32>
    %c4_i32 = arith.constant 4 : i32
    %20 = arith.index_cast %c4_i32 : i32 to index
    %c0_7 = arith.constant 0 : index
    %21 = vector.load %arg1[%20, %c0_7] : memref<8x12xf32, #tpu.memory_space<vmem>>, vector<1x12xf32>
    %22 = arith.addf %21, %19 : vector<1x12xf32>
    %23 = math.tanh %22 : vector<1x12xf32>
    %c5_i32 = arith.constant 5 : i32
    %24 = arith.index_cast %c5_i32 : i32 to index
    %c0_8 = arith.constant 0 : index
    %25 = vector.load %arg1[%24, %c0_8] : memref<8x12xf32, #tpu.memory_space<vmem>>, vector<1x12xf32>
    %26 = arith.addf %25, %23 : vector<1x12xf32>
    %27 = math.tanh %26 : vector<1x12xf32>
    %c6_i32 = arith.constant 6 : i32
    %28 = arith.index_cast %c6_i32 : i32 to index
    %c0_9 = arith.constant 0 : index
    %29 = vector.load %arg1[%28, %c0_9] : memref<8x12xf32, #tpu.memory_space<vmem>>, vector<1x12xf32>
    %30 = arith.addf %29, %27 : vector<1x12xf32>
    %31 = math.tanh %30 : vector<1x12xf32>
    %c7_i32 = arith.constant 7 : i32
    %32 = arith.index_cast %c7_i32 : i32 to index
    %c0_10 = arith.constant 0 : index
    %33 = vector.load %arg1[%32, %c0_10] : memref<8x12xf32, #tpu.memory_space<vmem>>, vector<1x12xf32>
    %34 = arith.addf %33, %31 : vector<1x12xf32>
    %35 = math.tanh %34 : vector<1x12xf32>
    %c8_i32 = arith.constant 8 : i32
    %c0_11 = arith.constant 0 : index
    %c0_12 = arith.constant 0 : index
    %36 = vector.load %arg2[%c0_11, %c0_12] : memref<1x12xf32, #tpu.memory_space<vmem>>, vector<1x12xf32>
    tpu.vector_store %arg2[%c0_11, %c0_12], %35 {strides = array<i32>} : memref<1x12xf32, #tpu.memory_space<vmem>>, vector<1x12xf32>,
    return
  }
  func.func @transform_0(%arg0: i32) -> (i32, i32) {
    %c0_i32 = arith.constant 0 : i32
    %c0_i32_0 = arith.constant 0 : i32
    return %arg0, %c0_i32 : i32, i32
  }
  func.func @transform_1(%arg0: i32) -> (i32, i32) {
    %c0_i32 = arith.constant 0 : i32
    %c0_i32_0 = arith.constant 0 : i32
    %c0_i32_1 = arith.constant 0 : i32
    return %c0_i32, %c0_i32_0 : i32, i32
  }
}

</mosaic_0001>

<llo_original>
// kernel: tpu_custom_call.1
$region0: #{tpu_custom_call.1}
  #allocation0 [shape = 'u32[]', space=smem, size = 0x4, offset = 0x4, fixed_abs, tag = 'smem constant byte address 0x4 - core index']
  #allocation1 [shape = 'u32[72,128]{1,0:T(1,128)}', space=vmem, size = 0x9000, scoped, tag = 'internal scratch']
  %s0 = inlined_call_operand.hbm [shape: f32[8,12], index: 0, kind: input, shape index: {}]
  %s1 = inlined_call_operand.hbm [shape: f32[1,12], index: 1, kind: output, shape index: {}]
  %s2 = sld [smem:[#allocation0]]
  $region22: #{tpu_custom_call.1} parent=0
    _
  %s4 = ssub.s32 1, %s2
  %s5 = scalar_select 0, %s4, %s2
  $region1: #{tpu_custom_call.1} parent=0
    #allocation2 [shape = 'u8[4096]{0}', space=vmem, size = 0x1000, scoped, tag = 'input window, operand 0, single buffered']
    #allocation3 [shape = 's32[1]{0}', space=sflag, size = 0x4, scoped, tag = 'scoped memory for tpu_custom_call.1']
    #allocation4 [shape = 's32[1]{0}', space=sflag, size = 0x4, scoped, tag = 'scoped memory for tpu_custom_call.1']
    #allocation5 [shape = 'u8[512]{0}', space=vmem, size = 0x400, scoped, tag = 'output window, operand 0, single buffered']
    %6 = vsyncpa [#allocation3], 0
    %7 = vsyncpa [#allocation4], 0
    // Predicated region
    $region2: #{tpu_custom_call.1} parent=1 // pred_check
      _
    $region3: #{tpu_custom_call.1} parent=1 // pred_check_branch
      %9 = sbr.rel (0) target = $region5
    $region4: #{tpu_custom_call.1} parent=1 // pred_region
      %11 = vsyncadd [#allocation3], 0
      %s13 = sshll.u32 %s0, 4
      %s14 = int_to_ptr.hbm [resolvable:$true] %s13
      %s15 = sshll.u32 [#allocation2], 4
      %s16 = int_to_ptr.vmem [resolvable:$true] %s15
      %18 = dma.hbm_to_vmem [thread:$0]  %s14, 128, %s16, [#allocation3]
    $region5: #{tpu_custom_call.1} parent=1 // pred_fallthru
      _
    // Predicated region
    $region6: #{tpu_custom_call.1} parent=1 // pred_check
      _
    $region7: #{tpu_custom_call.1} parent=1 // pred_check_branch
      %20 = sbr.rel (0) target = $region9
    $region8: #{tpu_custom_call.1} parent=1 // pred_region
      %22 = dma.done [#allocation3], 128
    $region9: #{tpu_custom_call.1} parent=1 // pred_fallthru
      _
    %p23 = scmp.eq.s32.totalorder 0, 0
    // Predicated region
    $region10: #{tpu_custom_call.1} parent=1 // pred_check
      %p24 = pneg %p23
    $region11: #{tpu_custom_call.1} parent=1 // pred_check_branch
      %26 = sbr.rel (%p24) target = $region13
    $region12: #{tpu_custom_call.1} parent=1 // pred_region
      %vm27 = vcmask 90112
      %28 = vst.msk [vmem:[#allocation5] sm:$0x1] %vm27, 0.0
    $region13: #{tpu_custom_call.1} parent=1 // pred_fallthru
      _
    %v29 = vld [vmem:[#allocation5] sm:$0x1]
    %v30 = vld [vmem:[#allocation2] sm:$0x1]
    %v31 = vadd.f32 %v30, %v29
    %v32 = vtanh.pop %v31
    %v33 = vld [vmem:[#allocation2 + $0x1] sm:$0x1]
    %v34 = vadd.f32 %v33, %v32
    %v35 = vtanh.pop %v34
    %v36 = vld [vmem:[#allocation2 + $0x2] sm:$0x1]
    %v37 = vadd.f32 %v36, %v35
    %v38 = vtanh.pop %v37
    %v39 = vld [vmem:[#allocation2 + $0x3] sm:$0x1]
    %v40 = vadd.f32 %v39, %v38
    %v41 = vtanh.pop %v40
    %v42 = vld [vmem:[#allocation2 + $0x4] sm:$0x1]
    %v43 = vadd.f32 %v42, %v41
    %v44 = vtanh.pop %v43
    %v45 = vld [vmem:[#allocation2 + $0x5] sm:$0x1]
    %v46 = vadd.f32 %v45, %v44
    %v47 = vtanh.pop %v46
    %v48 = vld [vmem:[#allocation2 + $0x6] sm:$0x1]
    %v49 = vadd.f32 %v48, %v47
    %v50 = vtanh.pop %v49
    %v51 = vld [vmem:[#allocation2 + $0x7] sm:$0x1]
    %v52 = vadd.f32 %v51, %v50
    %v53 = vtanh.pop %v52
    %vm54 = vcmask 90112
    %55 = vst.msk [vmem:[#allocation5] sm:$0x1] %vm54, %v53
    // Predicated region
    $region14: #{tpu_custom_call.1} parent=1 // pred_check
      _
    $region15: #{tpu_custom_call.1} parent=1 // pred_check_branch
      %57 = sbr.rel (0) target = $region17
    $region16: #{tpu_custom_call.1} parent=1 // pred_region
      %59 = vsyncadd [#allocation4], 0
      %s61 = sshll.u32 [#allocation5], 4
      %s62 = int_to_ptr.vmem [resolvable:$true] %s61
      %s63 = sshll.u32 %s1, 4
      %s64 = int_to_ptr.hbm [resolvable:$true] %s63
      %66 = dma.vmem_to_hbm [thread:$0]  %s62, 16, %s64, [#allocation4]
    $region17: #{tpu_custom_call.1} parent=1 // pred_fallthru
      _
    // Predicated region
    $region18: #{tpu_custom_call.1} parent=1 // pred_check
      _
    $region19: #{tpu_custom_call.1} parent=1 // pred_check_branch
      %68 = sbr.rel (0) target = $region21
    $region20: #{tpu_custom_call.1} parent=1 // pred_region
      %70 = dma.done [#allocation4], 16
    $region21: #{tpu_custom_call.1} parent=1 // pred_fallthru
      _
    %71 = vsyncpa [#allocation3], 1
    %72 = vsyncpa [#allocation4], 1

</llo_original>
